<compile_context>
chip_gen: v5e
topology: v5e:2x2
jax: 0.10.0
libtpu: 0.0.40
codegen_flags: <defaults>
</compile_context>

<pallas_src>
import functools

import jax
import jax.numpy as jnp
from jax.experimental import pallas as pl
from jax.experimental.pallas import tpu as pltpu


def _sap_kernel(x_ref, o_ref, *, hw, fold, inv_hw):
    # x_ref: (tile_rows, fold*hw)   o_ref: (tile_rows, fold)
    x = x_ref[...]
    if fold == 1:
        s = jnp.sum(x, axis=-1, keepdims=True, dtype=jnp.float32)
    else:
        s = jnp.concatenate(
            [
                jnp.sum(
                    x[:, j * hw:(j + 1) * hw],
                    axis=-1,
                    keepdims=True,
                    dtype=jnp.float32,
                )
                for j in range(fold)
            ],
            axis=-1,
        )
    o_ref[...] = (s * inv_hw).astype(o_ref.dtype)


def _round_up(v, m):
    return -(-v // m) * m


def spatial_attention_pooling(x, *, block_bytes=2 * 1024 * 1024):
    """AdaptiveAvgPool3d((None, 1, 1)) for NCDHW input via a Pallas TPU kernel."""
    N, C, D, H, W = x.shape
    M = N * C * D
    HW = H * W
    dtype_bytes = jnp.dtype(x.dtype).itemsize
    sublane = {4: 8, 2: 16, 1: 32}.get(dtype_bytes, 8)

    # Fold rows along the lane axis when the spatial extent is narrower than a vreg.
    fold = 1
    if HW < 128:
        fold = max(1, min(128 // HW, 32))
    lane_w = fold * HW
    rows_folded = -(-M // fold)  # ceil

    # Row tile from the VMEM byte budget, rounded down to a sublane multiple.
    tile_rows = max(sublane, (block_bytes // (lane_w * dtype_bytes)) // sublane * sublane)
    # Don't overshoot the data; prefer >= 2 grid steps (v7x megacore).
    cap = rows_folded if rows_folded <= sublane else -(-rows_folded // 2)
    cap = _round_up(max(cap, 1), sublane)
    tile_rows = min(tile_rows, cap)

    num_tiles = -(-rows_folded // tile_rows)
    rows_pad = num_tiles * tile_rows
    m_pad = rows_pad * fold

    x2 = x.reshape(M, HW)
    if m_pad != M:
        x2 = jnp.pad(x2, ((0, m_pad - M), (0, 0)))
    xf = x2.reshape(rows_pad, lane_w)

    kernel = functools.partial(_sap_kernel, hw=HW, fold=fold, inv_hw=1.0 / HW)

    out = pl.pallas_call(
        kernel,
        out_shape=jax.ShapeDtypeStruct((rows_pad, fold), x.dtype),
        grid=(num_tiles,),
        in_specs=[pl.BlockSpec((tile_rows, lane_w), lambda i: (i, 0))],
        out_specs=pl.BlockSpec((tile_rows, fold), lambda i: (i, 0)),
        compiler_params=pltpu.CompilerParams(
            dimension_semantics=("parallel",),
        ),
        cost_estimate=pl.CostEstimate(
            flops=M * HW,
            transcendentals=0,
            bytes_accessed=M * HW * dtype_bytes + M * dtype_bytes,
        ),
    )(xf)

    # Row-major unfold: flattened output element k is the mean of original row k.
    return out.reshape(-1)[:M].reshape(N, C, D, 1, 1)


if __name__ == "__main__":
    key = jax.random.PRNGKey(0)
    # Small shapes consistent with a 3-D feature-map input: (N, C, D, H, W)
    N, C, D, H, W = 2, 4, 4, 8, 8
    x = jax.random.normal(key, (N, C, D, H, W), dtype=jnp.float32)

    y = jax.block_until_ready(spatial_attention_pooling(x))

    # Sanity-check against plain-JAX reference (mean over H, W).
    y_ref = jnp.mean(x, axis=(3, 4), keepdims=True)
    assert y.shape == (N, C, D, 1, 1), y.shape
    assert jnp.allclose(y, y_ref, atol=1e-5, rtol=1e-5), float(jnp.max(jnp.abs(y - y_ref)))

    print("KERNEL_OK")
</pallas_src>

<mosaic_0001>
module attributes {stable_mosaic.version = 11 : i64} {
  func.func @_sap_kernel(%arg0: i32, %arg1: memref<8x128xf32, #tpu.memory_space<vmem>>, %arg2: memref<8x2xf32, #tpu.memory_space<vmem>>) attributes {dimension_semantics = [#tpu.dimension_semantics<parallel>], iteration_bounds = array<i64: 2>, scalar_prefetch = 0 : i64, scratch_operands = 0 : i64, tpu.core_type = #tpu.core_type<tc>, window_params = [{transform_indices = @transform_0, window_bounds = array<i64: 8, 128>}, {transform_indices = @transform_1, window_bounds = array<i64: 8, 2>}]} {
    %c0 = arith.constant 0 : index
    %c0_0 = arith.constant 0 : index
    %0 = vector.load %arg1[%c0, %c0_0] : memref<8x128xf32, #tpu.memory_space<vmem>>, vector<8x128xf32>
    %1 = vector.extract_strided_slice %0 {offsets = [0, 0], sizes = [8, 64], strides = [1, 1]} : vector<8x128xf32> to vector<8x64xf32>
    %cst = arith.constant dense<0.000000e+00> : vector<8xf32>
    %2 = vector.multi_reduction <add>, %1, %cst [1] : vector<8x64xf32> to vector<8xf32>
    %3 = vector.shape_cast %2 : vector<8xf32> to vector<8x1xf32>
    %4 = vector.extract_strided_slice %0 {offsets = [0, 64], sizes = [8, 64], strides = [1, 1]} : vector<8x128xf32> to vector<8x64xf32>
    %cst_1 = arith.constant dense<0.000000e+00> : vector<8xf32>
    %5 = vector.multi_reduction <add>, %4, %cst_1 [1] : vector<8x64xf32> to vector<8xf32>
    %6 = vector.shape_cast %5 : vector<8xf32> to vector<8x1xf32>
    %7 = tpu.concatenate %3, %6 in 1 : vector<8x1xf32>, vector<8x1xf32> -> vector<8x2xf32>
    %cst_2 = arith.constant 1.562500e-02 : f32
    %8 = vector.broadcast %cst_2 : f32 to vector<8x2xf32>
    %9 = arith.mulf %7, %8 : vector<8x2xf32>
    %c0_3 = arith.constant 0 : index
    %c0_4 = arith.constant 0 : index
    %10 = vector.load %arg2[%c0_3, %c0_4] : memref<8x2xf32, #tpu.memory_space<vmem>>, vector<8x2xf32>
    tpu.vector_store %arg2[%c0_3, %c0_4], %9 {strides = array<i32>} : memref<8x2xf32, #tpu.memory_space<vmem>>, vector<8x2xf32>,
    return
  }
  func.func @transform_0(%arg0: i32) -> (i32, i32) {
    %c0_i32 = arith.constant 0 : i32
    %c0_i32_0 = arith.constant 0 : i32
    return %arg0, %c0_i32 : i32, i32
  }
  func.func @transform_1(%arg0: i32) -> (i32, i32) {
    %c0_i32 = arith.constant 0 : i32
    %c0_i32_0 = arith.constant 0 : i32
    return %arg0, %c0_i32 : i32, i32
  }
}

</mosaic_0001>

<llo_original>
// kernel: tpu_custom_call.1
$region0: #{tpu_custom_call.1}
  #allocation0 [shape = 'u32[]', space=smem, size = 0x4, offset = 0x4, fixed_abs, tag = 'smem constant byte address 0x4 - core index']
  #allocation1 [shape = 'u32[72,128]{1,0:T(1,128)}', space=vmem, size = 0x9000, scoped, tag = 'internal scratch']
  %s0 = inlined_call_operand.hbm [shape: f32[16,128], index: 0, kind: input, shape index: {}]
  %s1 = inlined_call_operand.vmem [shape: f32[16,2], index: 1, kind: output, shape index: {}]
  %s2 = sld [smem:[#allocation0]]
  $region41: #{tpu_custom_call.1} parent=0
    _
  %s4 = ssub.s32 1, %s2
  %s5 = scalar_select 0, %s4, %s2
  $region1: #{tpu_custom_call.1} parent=0
    #allocation2 [shape = 'u8[8192]{0}', space=vmem, size = 0x2000, scoped, tag = 'input window, operand 0']
    #allocation3 [shape = 's32[2]{0}', space=sflag, size = 0x8, scoped, tag = 'scoped memory for tpu_custom_call.1']
    %6 = vsyncpa [#allocation3], 0
    %s7 = scalar_lea.sflag [#allocation3], 1
    %8 = vsyncpa %s7, 0
    loop: start=0, step=1, limit=4
    $region2: #{tpu_custom_call.1} parent=1 // loop_pre_header
      _
    $region3: #{tpu_custom_call.1} parent=1 // loop_header
      %s10 = sphi 0, %s14
      %p11 = scmp.ge.s32.totalorder %s10, 4
      %s20 = sphi 0, %s22
      %s23 = sphi 0, %s20
      %s24 = sphi 0, %s23
      %s40 = sphi 0, %s24
      %s46 = sphi 0, %s48
      %s49 = sphi 0, %s46
      %s50 = sphi 0, %s49
      %s66 = sphi 0, %s50
    $region4: #{tpu_custom_call.1} parent=1 // loop_header_branch
      %13 = sbr.rel (%p11) target = $region8
    $region5: #{tpu_custom_call.1} parent=1 // loop_body
      %s15 = ssub.s32 %s10, 1
      %s16 = ssub.s32 %s10, 2
      %s17 = sadd.s32 %s10, 1
      %s18 = ssub.s32 %s10, %s17
      %p19 = scmp.eq.s32.totalorder %s18, 0
      %s21 = sadd.s32 %s20, 1
      %s22 = scalar_select %p19, %s20, %s21
      %p25 = pneg %p19
      %p26 = scmp.eq.s32.totalorder %s10, 1
      %p27 = por %p25, %p26
      %p28 = scmp.ne.s32.totalorder %s20, %s23
      %p29 = scmp.eq.s32.totalorder %s10, 0
      %p30 = por %p28, %p29
      %p31 = scmp.ne.s32.totalorder %s20, %s23
      %p32 = scmp.eq.s32.totalorder %s15, 1
      %p33 = por %p31, %p32
      %p34 = scmp.ne.s32.totalorder %s23, %s24
      %p35 = scmp.eq.s32.totalorder %s15, 0
      %p36 = por %p34, %p35
      %p37 = scmp.ne.s32.totalorder %s23, %s24
      %p38 = scmp.eq.s32.totalorder %s16, 1
      %p39 = por %p37, %p38
      %p41 = scmp.ne.s32.totalorder %s24, %s40
      %p42 = scmp.eq.s32.totalorder %s16, 0
      %p43 = por %p41, %p42
      %s44 = ssub.s32 %s10, %s17
      %p45 = scmp.eq.s32.totalorder %s44, 0
      %s47 = sadd.s32 %s46, 1
      %s48 = scalar_select %p45, %s46, %s47
      %p51 = pneg %p45
      %p52 = scmp.eq.s32.totalorder %s10, 1
      %p53 = por %p51, %p52
      %p54 = scmp.ne.s32.totalorder %s46, %s49
      %p55 = scmp.eq.s32.totalorder %s10, 0
      %p56 = por %p54, %p55
      %p57 = scmp.ne.s32.totalorder %s46, %s49
      %p58 = scmp.eq.s32.totalorder %s15, 1
      %p59 = por %p57, %p58
      %p60 = scmp.ne.s32.totalorder %s49, %s50
      %p61 = scmp.eq.s32.totalorder %s15, 0
      %p62 = por %p60, %p61
      %p63 = scmp.ne.s32.totalorder %s49, %s50
      %p64 = scmp.eq.s32.totalorder %s16, 1
      %p65 = por %p63, %p64
      %p67 = scmp.ne.s32.totalorder %s50, %s66
      %p68 = scmp.eq.s32.totalorder %s16, 0
      %p69 = por %p67, %p68
      %p70 = scmp.le.s32.totalorder 1, %s10
      %p71 = scmp.lt.s32.totalorder %s10, 3
      %p72 = pnand %p70, %p71
      %p73 = pneg %p72
      // Predicated region
      $region9: #{tpu_custom_call.1} parent=5 // pred_check
        _
      $region10: #{tpu_custom_call.1} parent=5 // pred_check_branch
        %75 = sbr.rel (%p72) target = $region12
      $region11: #{tpu_custom_call.1} parent=5 // pred_region
        %s76 = ssub.s32 %s10, 1
      $region12: #{tpu_custom_call.1} parent=5 // pred_fallthru
        _
      %p77 = scmp.lt.s32.totalorder %s10, 2
      // Predicated region
      $region13: #{tpu_custom_call.1} parent=5 // pred_check
        %p78 = pneg %p77
      $region14: #{tpu_custom_call.1} parent=5 // pred_check_branch
        %80 = sbr.rel (%p78) target = $region16
      $region15: #{tpu_custom_call.1} parent=5 // pred_region
        // Predicated region
        $region17: #{tpu_custom_call.1} parent=15 // pred_check
          %p81 = pneg %p30
        $region18: #{tpu_custom_call.1} parent=15 // pred_check_branch
          %83 = sbr.rel (%p81) target = $region20
        $region19: #{tpu_custom_call.1} parent=15 // pred_region
          %s84 = sand.u32 %s20, 1
          %s85 = scalar_lea.sflag [#allocation3], %s84
          %s86 = sand.u32 %s20, 1
          %s87 = smul.addr %s86, 8
          %s88 = scalar_lea.vmem [#allocation2], %s87
          %90 = vsyncadd %s85, 0
          %s91 = smul.addr %s10, 8
          %s92 = scalar_lea.hbm %s0, %s91
          %s94 = sshll.u32 %s92, 4
          %s95 = int_to_ptr.hbm [resolvable:$true] %s94
          %s96 = sshll.u32 %s88, 4
          %s97 = int_to_ptr.vmem [resolvable:$true] %s96
          %99 = dma.hbm_to_vmem [thread:$0]  %s95, 128, %s97, %s85
        $region20: #{tpu_custom_call.1} parent=15 // pred_fallthru
          _
      $region16: #{tpu_custom_call.1} parent=5 // pred_fallthru
        _
      %p100 = scmp.le.s32.totalorder 1, %s10
      %p101 = scmp.lt.s32.totalorder %s10, 3
      %p102 = pnand %p100, %p101
      %p103 = pneg %p102
      // Predicated region
      $region21: #{tpu_custom_call.1} parent=5 // pred_check
        _
      $region22: #{tpu_custom_call.1} parent=5 // pred_check_branch
        %105 = sbr.rel (%p102) target = $region24
      $region23: #{tpu_custom_call.1} parent=5 // pred_region
        %s106 = ssub.s32 %s10, 1
        %s107 = sand.u32 %s23, 1
        %s108 = scalar_lea.sflag [#allocation3], %s107
        %s109 = sand.u32 %s23, 1
        %s110 = smul.addr %s109, 8
        %s111 = scalar_lea.vmem [#allocation2], %s110
        // Predicated region
        $region25: #{tpu_custom_call.1} parent=23 // pred_check
          %p112 = pneg %p36
        $region26: #{tpu_custom_call.1} parent=23 // pred_check_branch
          %114 = sbr.rel (%p112) target = $region28
        $region27: #{tpu_custom_call.1} parent=23 // pred_region
          %116 = dma.done %s108, 128
        $region28: #{tpu_custom_call.1} parent=23 // pred_fallthru
          _
        %s117 = sand.u32 %s23, 1
        %s118 = scalar_lea.sflag [#allocation3], %s117
        %s119 = sand.u32 %s23, 1
        %s120 = smul.addr %s119, 8
        %s121 = scalar_lea.vmem [#allocation2], %s120
        %p122 = pneg %p36
        %p123 = pneg %p33
        %p124 = pneg %p62
        %p125 = pneg %p59
        %p126 = scmp.lt.s32.totalorder %s15, 1
        %s127 = scalar_select %p126, %s15, 1
        %s128 = smul.addr %s127, 8
        %s129 = scalar_lea.vmem %s1, %s128
        %p130 = scmp.lt.s32.totalorder %s15, 1
        %s131 = scalar_select %p130, %s15, 1
        %s132 = smul.addr %s131, 8
        %s133 = scalar_lea.vmem %s1, %s132
        %v134 = vld [vmem:[%s111] sm:$0xff]
        %vm135 = vcmask 523264
        %v136 = vsel %vm135, %v134, 0.0
        %137 = vadd.xlane.f32.xlu0 %v136
        %v138 = vpop.xlane.xlu0 %137
        %140 = vrot.lane.b32.xlu0 %v134, 64
        %v141 = vpop.permute.xlu0 %140
        %v143 = vsel %vm135, %v141, 0.0
        %144 = vadd.xlane.f32.xlu0 %v143
        %v145 = vpop.xlane.xlu0 %144
        %vm146 = vcmask 7168
        %v147 = vsel %vm146, %v138, %v145
        %v148 = vmul.f32 %v147, 0.015625
        %vm149 = vcmask 15360
        %150 = vst.msk [vmem:[%s133] sm:$0xff] %vm149, %v148
        %p151 = scmp.lt.s32.totalorder %s15, 1
        %s152 = scalar_select %p151, %s15, 1
        %s153 = smul.addr %s152, 8
        %s154 = scalar_lea.vmem %s1, %s153
        // Predicated region
        $region29: #{tpu_custom_call.1} parent=23 // pred_check
          %p155 = pneg %p59
        $region30: #{tpu_custom_call.1} parent=23 // pred_check_branch
          %157 = sbr.rel (%p155) target = $region32
        $region31: #{tpu_custom_call.1} parent=23 // pred_region
          _
        $region32: #{tpu_custom_call.1} parent=23 // pred_fallthru
          _
      $region24: #{tpu_custom_call.1} parent=5 // pred_fallthru
        _
      %p158 = scmp.le.s32.totalorder 2, %s10
      // Predicated region
      $region33: #{tpu_custom_call.1} parent=5 // pred_check
        %p159 = pneg %p158
      $region34: #{tpu_custom_call.1} parent=5 // pred_check_branch
        %161 = sbr.rel (%p159) target = $region36
      $region35: #{tpu_custom_call.1} parent=5 // pred_region
        %s162 = ssub.s32 %s10, 2
        // Predicated region
        $region37: #{tpu_custom_call.1} parent=35 // pred_check
          %p163 = pneg %p65
        $region38: #{tpu_custom_call.1} parent=35 // pred_check_branch
          %165 = sbr.rel (%p163) target = $region40
        $region39: #{tpu_custom_call.1} parent=35 // pred_region
          %p166 = scmp.lt.s32.totalorder %s16, 1
          %s167 = scalar_select %p166, %s16, 1
          %s168 = smul.addr %s167, 8
          %s169 = scalar_lea.vmem %s1, %s168
        $region40: #{tpu_custom_call.1} parent=35 // pred_fallthru
          _
      $region36: #{tpu_custom_call.1} parent=5 // pred_fallthru
        _
    $region6: #{tpu_custom_call.1} parent=1 // loop_footer
      %s14 = sadd.s32 1, %s10
    $region7: #{tpu_custom_call.1} parent=1 // loop_footer_branch
      %9 = sbr.rel target = $region3
    $region8: #{tpu_custom_call.1} parent=1 // loop_exit
      _
    %170 = vsyncpa [#allocation3], 1
    %s171 = scalar_lea.sflag [#allocation3], 1
    %172 = vsyncpa %s171, 1

</llo_original>
